<compile_context>
chip_gen: v7x
topology: tpu7x:2x2x1
jax: 0.10.0
libtpu: 0.0.40
codegen_flags: <defaults>
</compile_context>

<pallas_src>
import jax
import jax.numpy as jnp
from jax import lax
from jax.experimental import pallas as pl
from jax.experimental.pallas import tpu as pltpu


def _round_up(x: int, m: int) -> int:
    return (x + m - 1) // m * m


def _mlp_kernel(x_ref, w1_ref, b1_ref, w2_ref, b2_ref, w3_ref, b3_ref, o_ref):
    # x_ref: [TB, D] natural-layout batch tile (single contiguous HBM region).
    # Ragged last tile invariant: rows past B hold unspecified padding; every op
    # below is lane-local (matmuls contract the feature axis, relu/tanh are
    # elementwise), so garbage never mixes into valid lanes and the wrapper slices
    # those rows off.
    x = x_ref[...].astype(w1_ref.dtype)

    # Layer 1: Linear(D -> H) + ReLU.   (Dropout = identity in eval mode.)
    # Contract the feature axis of both operands -> [H, TB]: batch lands on lanes.
    h1 = lax.dot_general(w1_ref[...], x, (((1,), (1,)), ((), ())),
                         preferred_element_type=jnp.float32)            # [H, TB] f32
    # Bias + ReLU in f32, cast in the same expression so only the narrow form of
    # h1 is materialized / spilled to VMEM.
    h1 = jnp.maximum(h1 + b1_ref[...], 0.0).astype(w2_ref.dtype)        # [H, TB]

    # Layer 2: Linear(H -> H//2) + ReLU. (Dropout = identity in eval mode.)
    h2 = jnp.dot(w2_ref[...], h1, preferred_element_type=jnp.float32)   # [H2, TB] f32
    h2 = jnp.maximum(h2 + b2_ref[...], 0.0).astype(w3_ref.dtype)        # [H2, TB]

    # Layer 3: Linear(H//2 -> 1) + Sigmoid, as a [1, H2] row matmul on the MXU
    # (which is nearly idle here); the [1, TB] result is already lane-dense.
    z = jnp.dot(w3_ref[...], h2, preferred_element_type=jnp.float32)    # [1, TB] f32
    z = z + b3_ref[...]
    y = 0.5 * jnp.tanh(0.5 * z) + 0.5     # sigmoid(z) == 0.5*tanh(z/2)+0.5 -> EUP slot

    o_ref[...] = y.reshape(o_ref.shape)   # lane-dense [1, 1, TB] store (no masked vst)


def _resident_spec(shape):
    """Whole array resident in VMEM: constant index_map, single-buffered."""
    idx = lambda i: (0,) * len(shape)
    try:
        return pl.BlockSpec(shape, idx, pipeline_mode=pl.Buffered(1))
    except (TypeError, ValueError):       # older API without pipeline_mode/Buffered(1)
        return pl.BlockSpec(shape, idx)


def process_optimization_nn(x, params, *, block_b=8192, compute_dtype=jnp.bfloat16):
    """Fused eval-mode forward pass of ProcessOptimizationNN.

    x: [B, D] float.  params: (w1, b1, w2, b2, w3, b3) with weights in PyTorch's
    [out, in] layout, biases as [out, 1] columns, and the final-layer weight as a
    [1, H//2] row.  Returns [B, 1] float32.

    block_b: batch tile (the lane axis inside the kernel).  Per-tile VMEM footprint
      is roughly TB * 1.4 KiB (bf16) / 1.9 KiB (f32): keep <= 8192 on v5e,
      <= 16384 on v7x; 16384-32768 is fine on v6e.
    compute_dtype: MXU operand dtype (bf16 default; accumulation, biases and the
      sigmoid stay f32).  Pass jnp.float32 for bit-accurate f32 matmuls (v5e-safe too).
    """
    w1, b1, w2, b2, w3, b3 = params
    B, D = x.shape
    H = w1.shape[0]
    H2 = w2.shape[0]

    # --- batch tiling ---------------------------------------------------------
    block_b = max(128, _round_up(int(block_b), 128))
    if B > block_b:
        TB = block_b                                   # many tiles; last may be ragged
    elif B >= 256:
        TB = _round_up(pl.cdiv(B, 2), 128)             # keep G >= 2 so both v7x TCs get work
    else:
        TB = B                                         # single full-array block
    G = pl.cdiv(B, TB)

    # --- MXU operand dtypes (x is streamed as given; cast per-tile in-kernel) ---
    w1c = w1.astype(compute_dtype)
    w2c = w2.astype(compute_dtype)
    w3c = w3.astype(compute_dtype)

    # --- VMEM budget (the x tile's lane dim pads to 128 in VMEM) ---------------
    cdb = jnp.dtype(compute_dtype).itemsize
    xb = jnp.dtype(x.dtype).itemsize
    vmem_est = (
        2 * TB * _round_up(D, 128) * xb            # double-buffered x tile (lane-padded)
        + 2 * 8 * _round_up(TB, 128) * 4           # double-buffered out tile (sublane-padded)
        + H * TB * (cdb + 4)                       # h1 stored narrow + f32 transient
        + H2 * TB * (cdb + 4)                      # h2 stored narrow + f32 transient
        + (w1c.size + w2c.size + w3c.size) * cdb
        + (b1.size + b2.size + b3.size) * 4
    )
    vmem_limit = int(min(100 * 2**20, max(32 * 2**20, vmem_est * 5 // 4 + (2 << 20))))

    flops = 2 * B * (D * H + H * H2 + H2)
    bytes_accessed = int(B * D * xb + G * TB * 4
                         + (w1c.size + w2c.size + w3c.size) * cdb
                         + (b1.size + b2.size + b3.size) * 4)

    out = pl.pallas_call(
        _mlp_kernel,
        out_shape=jax.ShapeDtypeStruct((G, 1, TB), jnp.float32),
        grid=(G,),
        in_specs=[
            pl.BlockSpec((TB, D), lambda i: (i, 0)),   # streamed / pipelined x tile
            _resident_spec(w1c.shape), _resident_spec(b1.shape),
            _resident_spec(w2c.shape), _resident_spec(b2.shape),
            _resident_spec(w3c.shape), _resident_spec(b3.shape),
        ],
        out_specs=pl.BlockSpec((1, 1, TB), lambda i: (i, 0, 0)),
        compiler_params=pltpu.CompilerParams(
            dimension_semantics=("parallel",),         # megacore-shards the batch on v7x
            vmem_limit_bytes=vmem_limit,
        ),
        cost_estimate=pl.CostEstimate(
            flops=flops, transcendentals=B, bytes_accessed=bytes_accessed),
    )(x, w1c, b1, w2c, b2, w3c, b3)

    # (G, 1, TB) -> (B, 1); drop the padded tail of a ragged last tile.
    return out.reshape(G * TB, 1)[:B]


def init_params(key, input_dim, hidden_dim=128):
    """PyTorch-style U(-1/sqrt(fan_in), +1/sqrt(fan_in)) init.
    Weights [out, in], biases [out, 1]; final-layer weight is the [1, hidden//2] row."""
    h2 = hidden_dim // 2
    ks = jax.random.split(key, 6)

    def lin(kw, kb, fan_in, fan_out):
        bound = 1.0 / (fan_in ** 0.5)
        w = jax.random.uniform(kw, (fan_out, fan_in), jnp.float32, -bound, bound)
        b = jax.random.uniform(kb, (fan_out, 1), jnp.float32, -bound, bound)
        return w, b

    w1, b1 = lin(ks[0], ks[1], input_dim, hidden_dim)
    w2, b2 = lin(ks[2], ks[3], hidden_dim, h2)
    w3, b3 = lin(ks[4], ks[5], h2, 1)                  # w3: [1, h2] row
    return (w1, b1, w2, b2, w3, b3)


def _reference(x, params):
    w1, b1, w2, b2, w3, b3 = params
    h1 = jnp.maximum(x @ w1.T + b1.T, 0.0)
    h2 = jnp.maximum(h1 @ w2.T + b2.T, 0.0)
    return jax.nn.sigmoid(h2 @ w3.T + b3.T)


if __name__ == "__main__":
    key = jax.random.PRNGKey(0)
    k_x, k_p, k_x2, k_p2 = jax.random.split(key, 4)

    # 1) Small demo shapes consistent with the module; exact f32 MXU path.
    batch, input_dim, hidden_dim = 8, 16, 32
    x = jax.random.normal(k_x, (batch, input_dim), dtype=jnp.float32)
    params = init_params(k_p, input_dim, hidden_dim)
    out = jax.block_until_ready(
        process_optimization_nn(x, params, compute_dtype=jnp.float32))
    ref = _reference(x, params)
    assert out.shape == (batch, 1)
    assert jnp.allclose(out, ref, atol=1e-4, rtol=1e-4)

    # 2) Default path (bf16 MXU operands, default block_b) at the module's default
    #    hidden width: B=300 -> TB=256, G=2 (megacore split + ragged last tile).
    batch2, dim2, hidden2 = 300, 16, 128
    x2 = jax.random.normal(k_x2, (batch2, dim2), dtype=jnp.float32)
    params2 = init_params(k_p2, dim2, hidden2)
    out2 = jax.block_until_ready(process_optimization_nn(x2, params2))
    ref2 = _reference(x2, params2)
    assert out2.shape == (batch2, 1)
    assert jnp.allclose(out2, ref2, atol=5e-2)

    # 3) Explicit small tile (TB=128, G=3, ragged last tile) on the exact f32 path.
    out3 = jax.block_until_ready(
        process_optimization_nn(x2, params2, block_b=128,
                                compute_dtype=jnp.float32))
    assert out3.shape == (batch2, 1)
    assert jnp.allclose(out3, ref2, atol=1e-4, rtol=1e-4)

    print("KERNEL_OK")
</pallas_src>

<mosaic_0001>
module attributes {stable_mosaic.version = 11 : i64} {
  func.func @_mlp_kernel(%arg0: i32, %arg1: memref<8x16xf32, #tpu.memory_space<vmem>>, %arg2: memref<32x16xf32, #tpu.memory_space<vmem>>, %arg3: memref<32x1xf32, #tpu.memory_space<vmem>>, %arg4: memref<16x32xf32, #tpu.memory_space<vmem>>, %arg5: memref<16x1xf32, #tpu.memory_space<vmem>>, %arg6: memref<1x16xf32, #tpu.memory_space<vmem>>, %arg7: memref<1x1xf32, #tpu.memory_space<vmem>>, %arg8: memref<1x1x8xf32, #tpu.memory_space<vmem>>) attributes {dimension_semantics = [#tpu.dimension_semantics<parallel>], iteration_bounds = array<i64: 1>, scalar_prefetch = 0 : i64, scratch_operands = 0 : i64, tpu.core_type = #tpu.core_type<tc>, window_params = [{transform_indices = @transform_0, window_bounds = array<i64: 8, 16>}, {pipeline_mode = #tpu.pipeline_mode<synchronous>, transform_indices = @transform_1, window_bounds = array<i64: 32, 16>}, {pipeline_mode = #tpu.pipeline_mode<synchronous>, transform_indices = @transform_2, window_bounds = array<i64: 32, 1>}, {pipeline_mode = #tpu.pipeline_mode<synchronous>, transform_indices = @transform_3, window_bounds = array<i64: 16, 32>}, {pipeline_mode = #tpu.pipeline_mode<synchronous>, transform_indices = @transform_4, window_bounds = array<i64: 16, 1>}, {pipeline_mode = #tpu.pipeline_mode<synchronous>, transform_indices = @transform_5, window_bounds = array<i64: 1, 16>}, {pipeline_mode = #tpu.pipeline_mode<synchronous>, transform_indices = @transform_6, window_bounds = array<i64: 1, 1>}, {transform_indices = @transform_7, window_bounds = array<i64: 1, 1, 8>}]} {
    %c0 = arith.constant 0 : index
    %c0_0 = arith.constant 0 : index
    %0 = vector.load %arg1[%c0, %c0_0] : memref<8x16xf32, #tpu.memory_space<vmem>>, vector<8x16xf32>
    %c0_1 = arith.constant 0 : index
    %c0_2 = arith.constant 0 : index
    %1 = vector.load %arg2[%c0_1, %c0_2] : memref<32x16xf32, #tpu.memory_space<vmem>>, vector<32x16xf32>
    %cst = arith.constant dense<0.000000e+00> : vector<32x8xf32>
    %2 = tpu.matmul %1, %0, %cst {dimension_numbers = #tpu.dot_dimension_numbers<[1], [1], [0], [0], [0, 0, 1, 0], [], []>} : vector<32x16xf32>, vector<8x16xf32>, vector<32x8xf32> -> vector<32x8xf32>
    %c0_3 = arith.constant 0 : index
    %c0_4 = arith.constant 0 : index
    %3 = vector.load %arg3[%c0_3, %c0_4] : memref<32x1xf32, #tpu.memory_space<vmem>>, vector<32x1xf32>
    %4 = vector.broadcast %3 : vector<32x1xf32> to vector<32x8xf32>
    %5 = arith.addf %2, %4 : vector<32x8xf32>
    %cst_5 = arith.constant 0.000000e+00 : f32
    %6 = vector.broadcast %cst_5 : f32 to vector<32x8xf32>
    %7 = arith.maximumf %5, %6 : vector<32x8xf32>
    %c0_6 = arith.constant 0 : index
    %c0_7 = arith.constant 0 : index
    %8 = vector.load %arg4[%c0_6, %c0_7] : memref<16x32xf32, #tpu.memory_space<vmem>>, vector<16x32xf32>
    %cst_8 = arith.constant dense<0.000000e+00> : vector<16x8xf32>
    %9 = tpu.matmul %8, %7, %cst_8 {dimension_numbers = #tpu.dot_dimension_numbers<[1], [0], [0], [1], [0, 0, 1, 1], [], []>} : vector<16x32xf32>, vector<32x8xf32>, vector<16x8xf32> -> vector<16x8xf32>
    %c0_9 = arith.constant 0 : index
    %c0_10 = arith.constant 0 : index
    %10 = vector.load %arg5[%c0_9, %c0_10] : memref<16x1xf32, #tpu.memory_space<vmem>>, vector<16x1xf32>
    %11 = vector.broadcast %10 : vector<16x1xf32> to vector<16x8xf32>
    %12 = arith.addf %9, %11 : vector<16x8xf32>
    %cst_11 = arith.constant 0.000000e+00 : f32
    %13 = vector.broadcast %cst_11 : f32 to vector<16x8xf32>
    %14 = arith.maximumf %12, %13 : vector<16x8xf32>
    %c0_12 = arith.constant 0 : index
    %c0_13 = arith.constant 0 : index
    %15 = vector.load %arg6[%c0_12, %c0_13] : memref<1x16xf32, #tpu.memory_space<vmem>>, vector<1x16xf32>
    %cst_14 = arith.constant dense<0.000000e+00> : vector<1x8xf32>
    %16 = tpu.matmul %15, %14, %cst_14 {dimension_numbers = #tpu.dot_dimension_numbers<[1], [0], [0], [1], [0, 0, 1, 1], [], []>} : vector<1x16xf32>, vector<16x8xf32>, vector<1x8xf32> -> vector<1x8xf32>
    %c0_15 = arith.constant 0 : index
    %c0_16 = arith.constant 0 : index
    %17 = vector.load %arg7[%c0_15, %c0_16] : memref<1x1xf32, #tpu.memory_space<vmem>>, vector<1x1xf32>
    %18 = vector.broadcast %17 : vector<1x1xf32> to vector<1x8xf32>
    %19 = arith.addf %16, %18 : vector<1x8xf32>
    %cst_17 = arith.constant 5.000000e-01 : f32
    %20 = vector.broadcast %cst_17 : f32 to vector<1x8xf32>
    %21 = arith.mulf %20, %19 : vector<1x8xf32>
    %22 = math.tanh %21 : vector<1x8xf32>
    %cst_18 = arith.constant 5.000000e-01 : f32
    %23 = vector.broadcast %cst_18 : f32 to vector<1x8xf32>
    %24 = arith.mulf %23, %22 : vector<1x8xf32>
    %cst_19 = arith.constant 5.000000e-01 : f32
    %25 = vector.broadcast %cst_19 : f32 to vector<1x8xf32>
    %26 = arith.addf %24, %25 : vector<1x8xf32>
    %27 = vector.shape_cast %26 : vector<1x8xf32> to vector<1x1x8xf32>
    %c0_20 = arith.constant 0 : index
    %c0_21 = arith.constant 0 : index
    %c0_22 = arith.constant 0 : index
    %28 = vector.load %arg8[%c0_20, %c0_21, %c0_22] : memref<1x1x8xf32, #tpu.memory_space<vmem>>, vector<1x1x8xf32>
    tpu.vector_store %arg8[%c0_20, %c0_21, %c0_22], %27 {strides = array<i32>} : memref<1x1x8xf32, #tpu.memory_space<vmem>>, vector<1x1x8xf32>,
    return
  }
  func.func @transform_0(%arg0: i32) -> (i32, i32) {
    %c0_i32 = arith.constant 0 : i32
    %c0_i32_0 = arith.constant 0 : i32
    return %arg0, %c0_i32 : i32, i32
  }
  func.func @transform_1(%arg0: i32) -> (i32, i32) {
    %c0_i32 = arith.constant 0 : i32
    %c0_i32_0 = arith.constant 0 : i32
    %c0_i32_1 = arith.constant 0 : i32
    return %c0_i32, %c0_i32_0 : i32, i32
  }
  func.func @transform_2(%arg0: i32) -> (i32, i32) {
    %c0_i32 = arith.constant 0 : i32
    %c0_i32_0 = arith.constant 0 : i32
    %c0_i32_1 = arith.constant 0 : i32
    return %c0_i32, %c0_i32_0 : i32, i32
  }
  func.func @transform_3(%arg0: i32) -> (i32, i32) {
    %c0_i32 = arith.constant 0 : i32
    %c0_i32_0 = arith.constant 0 : i32
    %c0_i32_1 = arith.constant 0 : i32
    return %c0_i32, %c0_i32_0 : i32, i32
  }
  func.func @transform_4(%arg0: i32) -> (i32, i32) {
    %c0_i32 = arith.constant 0 : i32
    %c0_i32_0 = arith.constant 0 : i32
    %c0_i32_1 = arith.constant 0 : i32
    return %c0_i32, %c0_i32_0 : i32, i32
  }
  func.func @transform_5(%arg0: i32) -> (i32, i32) {
    %c0_i32 = arith.constant 0 : i32
    %c0_i32_0 = arith.constant 0 : i32
    %c0_i32_1 = arith.constant 0 : i32
    return %c0_i32, %c0_i32_0 : i32, i32
  }
  func.func @transform_6(%arg0: i32) -> (i32, i32) {
    %c0_i32 = arith.constant 0 : i32
    %c0_i32_0 = arith.constant 0 : i32
    %c0_i32_1 = arith.constant 0 : i32
    return %c0_i32, %c0_i32_0 : i32, i32
  }
  func.func @transform_7(%arg0: i32) -> (i32, i32, i32) {
    %c0_i32 = arith.constant 0 : i32
    %c0_i32_0 = arith.constant 0 : i32
    %c0_i32_1 = arith.constant 0 : i32
    return %arg0, %c0_i32, %c0_i32_0 : i32, i32, i32
  }
}

</mosaic_0001>

<llo_original>
// kernel: tpu_custom_call.1
$region0: #{tpu_custom_call.1}
  #allocation0 [shape = 'u32[]', space=smem, size = 0x4, offset = 0x4, fixed_abs, tag = 'smem constant byte address 0x4 - core index']
  #allocation1 [shape = 'u32[144,128]{1,0:T(1,128)}', space=vmem, size = 0x12000, scoped, tag = 'internal scratch']
  #allocation2 [shape = 'f32[1,1]{1,0:T(1,128)S(1)}', space=vmem, size = 0x200, scoped, tag = 'scoped memory for tpu_custom_call.1']
  %s0 = inlined_call_operand.vmem [shape: f32[8,16], index: 0, kind: input, shape index: {}]
  %s1 = inlined_call_operand.vmem [shape: f32[32,16], index: 1, kind: input, shape index: {}]
  %s2 = inlined_call_operand.vmem [shape: f32[32,1], index: 2, kind: input, shape index: {}]
  %s3 = inlined_call_operand.vmem [shape: f32[16,32], index: 3, kind: input, shape index: {}]
  %s4 = inlined_call_operand.vmem [shape: f32[16,1], index: 4, kind: input, shape index: {}]
  %s5 = inlined_call_operand.vmem [shape: f32[1,16], index: 5, kind: input, shape index: {}]
  %s6 = inlined_call_operand.<no memory space> [shape: f32[1,1], index: 6, kind: input, shape index: {}]
  %s7 = inlined_call_operand.hbm [shape: f32[1,1,8], index: 7, kind: output, shape index: {}]
  %s8 = sld [smem:[#allocation0]]
  $region38: #{tpu_custom_call.1} parent=0
    _
  %s10 = ssub.s32 1, %s8
  %s11 = scalar_select 0, %s10, %s8
  %v12 = vstv %s6
  %13 = vst [vmem:[#allocation2] sm:$0x1] %v12
  $region1: #{tpu_custom_call.1} parent=0
    #allocation3 [shape = 'u8[512]{0}', space=vmem, size = 0x400, scoped, tag = 'output window, operand 0, single buffered']
    #allocation4 [shape = 's32[1]{0}', space=sflag, size = 0x4, scoped, tag = 'scoped memory for tpu_custom_call.1']
    %14 = vsyncpa [#allocation4], 0
    // Predicated region
    $region2: #{tpu_custom_call.1} parent=1 // pred_check
      _
    $region3: #{tpu_custom_call.1} parent=1 // pred_check_branch
      %16 = sbr.rel (0) target = $region5
    $region4: #{tpu_custom_call.1} parent=1 // pred_region
      _
    $region5: #{tpu_custom_call.1} parent=1 // pred_fallthru
      _
    // Predicated region
    $region6: #{tpu_custom_call.1} parent=1 // pred_check
      _
    $region7: #{tpu_custom_call.1} parent=1 // pred_check_branch
      %18 = sbr.rel (0) target = $region9
    $region8: #{tpu_custom_call.1} parent=1 // pred_region
      _
    $region9: #{tpu_custom_call.1} parent=1 // pred_fallthru
      _
    // Predicated region
    $region10: #{tpu_custom_call.1} parent=1 // pred_check
      _
    $region11: #{tpu_custom_call.1} parent=1 // pred_check_branch
      %20 = sbr.rel (0) target = $region13
    $region12: #{tpu_custom_call.1} parent=1 // pred_region
      _
    $region13: #{tpu_custom_call.1} parent=1 // pred_fallthru
      _
    // Predicated region
    $region14: #{tpu_custom_call.1} parent=1 // pred_check
      _
    $region15: #{tpu_custom_call.1} parent=1 // pred_check_branch
      %22 = sbr.rel (0) target = $region17
    $region16: #{tpu_custom_call.1} parent=1 // pred_region
      _
    $region17: #{tpu_custom_call.1} parent=1 // pred_fallthru
      _
    // Predicated region
    $region18: #{tpu_custom_call.1} parent=1 // pred_check
      _
    $region19: #{tpu_custom_call.1} parent=1 // pred_check_branch
      %24 = sbr.rel (0) target = $region21
    $region20: #{tpu_custom_call.1} parent=1 // pred_region
      _
    $region21: #{tpu_custom_call.1} parent=1 // pred_fallthru
      _
    // Predicated region
    $region22: #{tpu_custom_call.1} parent=1 // pred_check
      _
    $region23: #{tpu_custom_call.1} parent=1 // pred_check_branch
      %26 = sbr.rel (0) target = $region25
    $region24: #{tpu_custom_call.1} parent=1 // pred_region
      _
    $region25: #{tpu_custom_call.1} parent=1 // pred_fallthru
      _
    // Predicated region
    $region26: #{tpu_custom_call.1} parent=1 // pred_check
      _
    $region27: #{tpu_custom_call.1} parent=1 // pred_check_branch
      %28 = sbr.rel (0) target = $region29
    $region28: #{tpu_custom_call.1} parent=1 // pred_region
      _
    $region29: #{tpu_custom_call.1} parent=1 // pred_fallthru
      _
    %v29 = vld [vmem:[%s0] sm:$0xff]
    %v30 = vld [vmem:[%s1] sm:$0xff]
    %v31 = vld [vmem:[%s1 + $0x8] sm:$0xff]
    %v32 = vld [vmem:[%s1 + $0x10] sm:$0xff]
    %v33 = vld [vmem:[%s1 + $0x18] sm:$0xff]
    %v34 = vld [vmem:[%s2] sm:$0xff]
    %v35 = vld [vmem:[%s2 + $0x8] sm:$0xff]
    %v36 = vld [vmem:[%s2 + $0x10] sm:$0xff]
    %v37 = vld [vmem:[%s2 + $0x18] sm:$0xff]
    %39 = vset.pattern.permute.xlu0 0
    %40 = vperm.xlu0 %39, %v34
    %v41 = vpop.permute.xlu0 %40
    %44 = vset.pattern.permute.xlu0 0
    %45 = vperm.xlu0 %44, %v35
    %v46 = vpop.permute.xlu0 %45
    %49 = vset.pattern.permute.xlu0 0
    %50 = vperm.xlu0 %49, %v36
    %v51 = vpop.permute.xlu0 %50
    %54 = vset.pattern.permute.xlu0 0
    %55 = vperm.xlu0 %54, %v37
    %v56 = vpop.permute.xlu0 %55
    %vm58 = vcmask 130048
    %v60 = vsel %vm58, %v30, 0
    %v63 = vsel %vm58, %v31, 0
    %v66 = vsel %vm58, %v32, 0
    %v69 = vsel %vm58, %v33, 0
    %v72 = vsel %vm58, %v29, 0
    %74 = vmatprep.subr.mxu0 0.0
    %75 = vmatpush1.xpose.msra.mxu0 %v72
    %76 = vmatprep.subr.mxu0 0.0
    %77 = vmatpush1.xpose.msra.mxu0 0.0
    %78 = vmatprep.subr.mxu0 0.0
    %79 = vmatpush1.xpose.msra.mxu0 0.0
    %80 = vmatprep.subr.mxu0 0.0
    %81 = vmatpush1.xpose.msra.mxu0 0.0
    %82 = vmatprep.subr.mxu0 0.0
    %83 = vmatpush1.xpose.msra.mxu0 0.0
    %84 = vmatprep.subr.mxu0 0.0
    %85 = vmatpush1.xpose.msra.mxu0 0.0
    %86 = vmatprep.subr.mxu0 0.0
    %87 = vmatpush1.xpose.msra.mxu0 0.0
    %88 = vmatprep.subr.mxu0 0.0
    %89 = vmatpush1.xpose.msra.mxu0 0.0
    %90 = vmatprep.subr.mxu0 0.0
    %91 = vmatpush1.xpose.msra.mxu0 0.0
    %92 = vmatprep.subr.mxu0 0.0
    %93 = vmatpush1.xpose.msra.mxu0 0.0
    %94 = vmatprep.subr.mxu0 0.0
    %95 = vmatpush1.xpose.msra.mxu0 0.0
    %96 = vmatprep.subr.mxu0 0.0
    %97 = vmatpush1.xpose.msra.mxu0 0.0
    %98 = vmatprep.subr.mxu0 0.0
    %99 = vmatpush1.xpose.msra.mxu0 0.0
    %100 = vmatprep.subr.mxu0 0.0
    %101 = vmatpush1.xpose.msra.mxu0 0.0
    %102 = vmatprep.subr.mxu0 0.0
    %103 = vmatpush1.xpose.msra.mxu0 0.0
    %104 = vmatprep.subr.mxu0 0.0
    %105 = vmatpush1.xpose.msra.mxu0 0.0
    %106 = vmatprep.subr.mxu0 0.0
    %107 = vmatpush1.xpose.msra.mxu0 0.0
    %108 = vmatprep.subr.mxu0 0.0
    %109 = vmatpush1.xpose.msra.mxu0 0.0
    %110 = vmatprep.subr.mxu0 0.0
    %111 = vmatpush1.xpose.msra.mxu0 0.0
    %112 = vmatprep.subr.mxu0 0.0
    %113 = vmatpush1.xpose.msra.mxu0 0.0
    %114 = vmatprep.subr.mxu0 0.0
    %115 = vmatpush1.xpose.msra.mxu0 0.0
    %116 = vmatprep.subr.mxu0 0.0
    %117 = vmatpush1.xpose.msra.mxu0 0.0
    %118 = vmatprep.subr.mxu0 0.0
    %119 = vmatpush1.xpose.msra.mxu0 0.0
    %120 = vmatprep.subr.mxu0 0.0
    %121 = vmatpush1.xpose.msra.mxu0 0.0
    %122 = vmatprep.subr.mxu0 0.0
    %123 = vmatpush1.xpose.msra.mxu0 0.0
    %124 = vmatprep.subr.mxu0 0.0
    %125 = vmatpush1.xpose.msra.mxu0 0.0
    %126 = vmatprep.subr.mxu0 0.0
    %127 = vmatpush1.xpose.msra.mxu0 0.0
    %128 = vmatprep.subr.mxu0 0.0
    %129 = vmatpush1.xpose.msra.mxu0 0.0
    %130 = vmatprep.subr.mxu0 0.0
    %131 = vmatpush1.xpose.msra.mxu0 0.0
    %132 = vmatprep.subr.mxu0 0.0
    %133 = vmatpush1.xpose.msra.mxu0 0.0
    %134 = vmatprep.subr.mxu0 0.0
    %135 = vmatpush1.xpose.msra.mxu0 0.0
    %136 = vmatprep.subr.mxu0 0.0
    %137 = vmatpush1.xpose.msra.mxu0 0.0
    %138 = vmatprep.mubr.f32.mxu0 0.0
    %139 = vmatmul.mubr.f32.gmra.mrb[0].mxu0 %v60
    %v140 = vpop.f32.mrb[0].mxu0
    %v141 = vadd.f32 %v41, %v140
    %v142 = vpop.f32.mrb[0].mxu0
    %143 = vmatprep.mubr.f32.mxu0 0.0
    %144 = vmatmul.mubr.f32.gmra.mrb[0].mxu0 %v63
    %v145 = vpop.f32.mrb[0].mxu0
    %v146 = vadd.f32 %v46, %v145
    %v147 = vpop.f32.mrb[0].mxu0
    %148 = vmatprep.mubr.f32.mxu0 0.0
    %149 = vmatmul.mubr.f32.gmra.mrb[0].mxu0 %v66
    %v150 = vpop.f32.mrb[0].mxu0
    %v151 = vadd.f32 %v51, %v150
    %v152 = vpop.f32.mrb[0].mxu0
    %153 = vmatprep.mubr.f32.mxu0 0.0
    %154 = vmatmul.mubr.f32.gmra.mrb[0].mxu0 %v69
    %v155 = vpop.f32.mrb[0].mxu0
    %v156 = vadd.f32 %v56, %v155
    %v157 = vpop.f32.mrb[0].mxu0
    %158 = vdwg.mxu0
    %v159 = vmax.f32 %v141, 0.0
    %v160 = vmax.f32 %v146, 0.0
    %v161 = vmax.f32 %v151, 0.0
    %v162 = vmax.f32 %v156, 0.0
    %v163 = vld [vmem:[%s3] sm:$0xff]
    %v164 = vld [vmem:[%s3 + $0x8] sm:$0xff]
    %v165 = vld [vmem:[%s4] sm:$0xff]
    %v166 = vld [vmem:[%s4 + $0x8] sm:$0xff]
    %168 = vset.pattern.permute.xlu0 0
    %169 = vperm.xlu0 %168, %v165
    %v170 = vpop.permute.xlu0 %169
    %173 = vset.pattern.permute.xlu0 0
    %174 = vperm.xlu0 %173, %v166
    %v175 = vpop.permute.xlu0 %174
    %vm177 = vcmask 261120
    %v179 = vsel %vm177, %v163, 0
    %v182 = vsel %vm177, %v164, 0
    %184 = vmatprep.subr.mxu0 0.0
    %185 = vmatpush1.msra.mxu0 %v159
    %186 = vmatprep.subr.mxu0 0.0
    %187 = vmatpush1.msra.mxu0 %v160
    %188 = vmatprep.subr.mxu0 0.0
    %189 = vmatpush1.msra.mxu0 %v161
    %190 = vmatprep.subr.mxu0 0.0
    %191 = vmatpush1.msra.mxu0 %v162
    %192 = vmatprep.subr.mxu0 0.0
    %193 = vmatpush1.msra.mxu0 0.0
    %194 = vmatprep.subr.mxu0 0.0
    %195 = vmatpush1.msra.mxu0 0.0
    %196 = vmatprep.subr.mxu0 0.0
    %197 = vmatpush1.msra.mxu0 0.0
    %198 = vmatprep.subr.mxu0 0.0
    %199 = vmatpush1.msra.mxu0 0.0
    %200 = vmatprep.subr.mxu0 0.0
    %201 = vmatpush1.msra.mxu0 0.0
    %202 = vmatprep.subr.mxu0 0.0
    %203 = vmatpush1.msra.mxu0 0.0
    %204 = vmatprep.subr.mxu0 0.0
    %205 = vmatpush1.msra.mxu0 0.0
    %206 = vmatprep.subr.mxu0 0.0
    %207 = vmatpush1.msra.mxu0 0.0
    %208 = vmatprep.subr.mxu0 0.0
    %209 = vmatpush1.msra.mxu0 0.0
    %210 = vmatprep.subr.mxu0 0.0
    %211 = vmatpush1.msra.mxu0 0.0
    %212 = vmatprep.subr.mxu0 0.0
    %213 = vmatpush1.msra.mxu0 0.0
    %214 = vmatprep.subr.mxu0 0.0
    %215 = vmatpush1.msra.mxu0 0.0
    %216 = vmatprep.subr.mxu0 0.0
    %217 = vmatpush1.msra.mxu0 0.0
    %218 = vmatprep.subr.mxu0 0.0
    %219 = vmatpush1.msra.mxu0 0.0
    %220 = vmatprep.subr.mxu0 0.0
    %221 = vmatpush1.msra.mxu0 0.0
    %222 = vmatprep.subr.mxu0 0.0
    %223 = vmatpush1.msra.mxu0 0.0
    %224 = vmatprep.subr.mxu0 0.0
    %225 = vmatpush1.msra.mxu0 0.0
    %226 = vmatprep.subr.mxu0 0.0
    %227 = vmatpush1.msra.mxu0 0.0
    %228 = vmatprep.subr.mxu0 0.0
    %229 = vmatpush1.msra.mxu0 0.0
    %230 = vmatprep.subr.mxu0 0.0
    %231 = vmatpush1.msra.mxu0 0.0
    %232 = vmatprep.subr.mxu0 0.0
    %233 = vmatpush1.msra.mxu0 0.0
    %234 = vmatprep.subr.mxu0 0.0
    %235 = vmatpush1.msra.mxu0 0.0
    %236 = vmatprep.subr.mxu0 0.0
    %237 = vmatpush1.msra.mxu0 0.0
    %238 = vmatprep.subr.mxu0 0.0
    %239 = vmatpush1.msra.mxu0 0.0
    %240 = vmatprep.subr.mxu0 0.0
    %241 = vmatpush1.msra.mxu0 0.0
    %242 = vmatprep.subr.mxu0 0.0
    %243 = vmatpush1.msra.mxu0 0.0
    %244 = vmatprep.subr.mxu0 0.0
    %245 = vmatpush1.msra.mxu0 0.0
    %246 = vmatprep.subr.mxu0 0.0
    %247 = vmatpush1.msra.mxu0 0.0
    %248 = vmatprep.mubr.f32.mxu0 0.0
    %249 = vmatmul.mubr.f32.gmra.mrb[0].mxu0 %v179
    %v250 = vpop.f32.mrb[0].mxu0
    %v251 = vadd.f32 %v170, %v250
    %v252 = vpop.f32.mrb[0].mxu0
    %253 = vmatprep.mubr.f32.mxu0 0.0
    %254 = vmatmul.mubr.f32.gmra.mrb[0].mxu0 %v182
    %v255 = vpop.f32.mrb[0].mxu0
    %v256 = vadd.f32 %v175, %v255
    %v257 = vpop.f32.mrb[0].mxu0
    %258 = vdwg.mxu0
    %v259 = vmax.f32 %v251, 0.0
    %v260 = vmax.f32 %v256, 0.0
    %v261 = vld [vmem:[%s5] sm:$0x1]
    %v262 = vld [vmem:[#allocation2] sm:$0x1]
    %264 = vset.pattern.permute.xlu0 0
    %265 = vperm.xlu0 %264, %v262
    %v266 = vpop.permute.xlu0 %265
    %v268 = vlaneseq
    %v269 = vshrl.u32 %v268, 7
    %v270 = vsub.s32 0, %v269
    %v271 = vrot.slane %v266, %v270
    %v273 = vsel %vm58, %v261, 0
    %275 = vmatprep.subr.mxu0 0.0
    %276 = vmatpush1.msra.mxu0 %v259
    %277 = vmatprep.subr.mxu0 0.0
    %278 = vmatpush1.msra.mxu0 %v260
    %279 = vmatprep.subr.mxu0 0.0
    %280 = vmatpush1.msra.mxu0 0.0
    %281 = vmatprep.subr.mxu0 0.0
    %282 = vmatpush1.msra.mxu0 0.0
    %283 = vmatprep.subr.mxu0 0.0
    %284 = vmatpush1.msra.mxu0 0.0
    %285 = vmatprep.subr.mxu0 0.0
    %286 = vmatpush1.msra.mxu0 0.0
    %287 = vmatprep.subr.mxu0 0.0
    %288 = vmatpush1.msra.mxu0 0.0
    %289 = vmatprep.subr.mxu0 0.0
    %290 = vmatpush1.msra.mxu0 0.0
    %291 = vmatprep.subr.mxu0 0.0
    %292 = vmatpush1.msra.mxu0 0.0
    %293 = vmatprep.subr.mxu0 0.0
    %294 = vmatpush1.msra.mxu0 0.0
    %295 = vmatprep.subr.mxu0 0.0
    %296 = vmatpush1.msra.mxu0 0.0
    %297 = vmatprep.subr.mxu0 0.0
    %298 = vmatpush1.msra.mxu0 0.0
    %299 = vmatprep.subr.mxu0 0.0
    %300 = vmatpush1.msra.mxu0 0.0
    %301 = vmatprep.subr.mxu0 0.0
    %302 = vmatpush1.msra.mxu0 0.0
    %303 = vmatprep.subr.mxu0 0.0
    %304 = vmatpush1.msra.mxu0 0.0
    %305 = vmatprep.subr.mxu0 0.0
    %306 = vmatpush1.msra.mxu0 0.0
    %307 = vmatprep.subr.mxu0 0.0
    %308 = vmatpush1.msra.mxu0 0.0
    %309 = vmatprep.subr.mxu0 0.0
    %310 = vmatpush1.msra.mxu0 0.0
    %311 = vmatprep.subr.mxu0 0.0
    %312 = vmatpush1.msra.mxu0 0.0
    %313 = vmatprep.subr.mxu0 0.0
    %314 = vmatpush1.msra.mxu0 0.0
    %315 = vmatprep.subr.mxu0 0.0
    %316 = vmatpush1.msra.mxu0 0.0
    %317 = vmatprep.subr.mxu0 0.0
    %318 = vmatpush1.msra.mxu0 0.0
    %319 = vmatprep.subr.mxu0 0.0
    %320 = vmatpush1.msra.mxu0 0.0
    %321 = vmatprep.subr.mxu0 0.0
    %322 = vmatpush1.msra.mxu0 0.0
    %323 = vmatprep.subr.mxu0 0.0
    %324 = vmatpush1.msra.mxu0 0.0
    %325 = vmatprep.subr.mxu0 0.0
    %326 = vmatpush1.msra.mxu0 0.0
    %327 = vmatprep.subr.mxu0 0.0
    %328 = vmatpush1.msra.mxu0 0.0
    %329 = vmatprep.subr.mxu0 0.0
    %330 = vmatpush1.msra.mxu0 0.0
    %331 = vmatprep.subr.mxu0 0.0
    %332 = vmatpush1.msra.mxu0 0.0
    %333 = vmatprep.subr.mxu0 0.0
    %334 = vmatpush1.msra.mxu0 0.0
    %335 = vmatprep.subr.mxu0 0.0
    %336 = vmatpush1.msra.mxu0 0.0
    %337 = vmatprep.subr.mxu0 0.0
    %338 = vmatpush1.msra.mxu0 0.0
    %339 = vmatprep.mubr.f32.mxu0 0.0
    %340 = vmatmul.mubr.f32.gmra.mrb[0].mxu0 %v273
    %v341 = vpop.f32.mrb[0].mxu0
    %v342 = vadd.f32 %v271, %v341
    %v343 = vpop.f32.mrb[0].mxu0
    %344 = vdwg.mxu0
    %v345 = vmul.f32 %v342, 0.5
    %v346 = vtanh.pop %v345
    %v347 = vmul.f32 %v346, 0.5
    %v348 = vadd.f32 %v347, 0.5
    %vm349 = vcmask 57344
    %350 = vst.msk [vmem:[#allocation3] sm:$0x1] %vm349, %v348
    // Predicated region
    $region30: #{tpu_custom_call.1} parent=1 // pred_check
      _
    $region31: #{tpu_custom_call.1} parent=1 // pred_check_branch
      %352 = sbr.rel (0) target = $region33
    $region32: #{tpu_custom_call.1} parent=1 // pred_region
      %s354 = ssub.s32 16, 16
      %355 = vsyncadd [#allocation4], %s354
      %s357 = sshll.u32 [#allocation3], 4
      %s358 = int_to_ptr.vmem [resolvable:$true] %s357
      %360 = dma.vmem_to_hbm [thread:$0]  %s358, 16, %s7, [#allocation4]
    $region33: #{tpu_custom_call.1} parent=1 // pred_fallthru
      _
    // Predicated region
    $region34: #{tpu_custom_call.1} parent=1 // pred_check
      _
    $region35: #{tpu_custom_call.1} parent=1 // pred_check_branch
      %362 = sbr.rel (0) target = $region37
    $region36: #{tpu_custom_call.1} parent=1 // pred_region
      %363 = dma.done [#allocation4], 16
    $region37: #{tpu_custom_call.1} parent=1 // pred_fallthru
      _
    %364 = vsyncpa [#allocation4], 1

</llo_original>
